<compile_context>
chip_gen: v5e
topology: v5e:2x2
jax: 0.10.0
libtpu: 0.0.40
codegen_flags: <defaults>
</compile_context>

<pallas_src>
import jax
import jax.numpy as jnp
from jax.experimental import pallas as pl
from jax.experimental.pallas import tpu as pltpu


# ----------------------------------- Pallas kernel -----------------------------------

def _pointwise_conv_kernel(x_ref, w_ref, o_ref):
    """out[0] = W @ x[0].

    x_ref: [1, Cin, TM]   (channels on sublanes, spatial on lanes)
    w_ref: [Cout, Cin]
    o_ref: [1, Cout, TM]  (lane-dense output)
    """
    x = x_ref[0]                                    # [Cin, TM]
    w = w_ref[...]                                  # [Cout, Cin]
    o_ref[0] = jnp.dot(w, x, preferred_element_type=jnp.float32).astype(o_ref.dtype)


def _pick_tile(m):
    """Largest lane-aligned spatial tile (multiple of 128) up to 2048."""
    for t in (2048, 1024, 512, 256, 128):
        if m >= t:
            return t
    return 128


def pointwise_conv3d(x2, w):
    """x2: [B, Cin, M] (spatial flattened, channels-first), w: [Cout, Cin] -> [B, Cout, M]."""
    bsz, cin, m = x2.shape
    cout = w.shape[0]

    tm = _pick_tile(m)
    m_pad = ((m + tm - 1) // tm) * tm
    if m_pad != m:
        x2 = jnp.pad(x2, ((0, 0), (0, 0), (0, m_pad - m)))

    out = pl.pallas_call(
        _pointwise_conv_kernel,
        out_shape=jax.ShapeDtypeStruct((bsz, cout, m_pad), jnp.float32),
        grid_spec=pltpu.PrefetchScalarGridSpec(
            num_scalar_prefetch=0,
            grid=(bsz, m_pad // tm),
            in_specs=[
                pl.BlockSpec((1, cin, tm), lambda b, mi: (b, 0, mi)),
                pl.BlockSpec((cout, cin), lambda b, mi: (0, 0)),
            ],
            out_specs=pl.BlockSpec((1, cout, tm), lambda b, mi: (b, 0, mi)),
        ),
        compiler_params=pltpu.CompilerParams(
            dimension_semantics=("parallel", "parallel"),
        ),
    )(x2, w)

    if m_pad != m:
        out = out[:, :, :m]
    return out


# ------------------------------------ forward pass ------------------------------------

def header_forward(x, conv_weight):
    """Header.forward: ssc_logit = Conv3d(geo_feat_channels -> class_num, k=1, bias=False)(x).

    x:           [B, Cin, D, H, W]   (PyTorch NCDHW)
    conv_weight: [Cout, Cin, 1, 1, 1] (PyTorch Conv3d weight layout)
    returns:     [B, Cout, D, H, W]
    """
    bsz, cin, d, h, w_ = x.shape
    cout = conv_weight.shape[0]
    wmat = conv_weight.reshape(cout, cin)           # 1x1x1 kernel -> plain matrix

    m = d * h * w_
    x2 = x.reshape(bsz, cin, m)                     # channels-first, spatial on lanes
    out = pointwise_conv3d(x2, wmat)                # [B, Cout, M]
    return out.reshape(bsz, cout, d, h, w_)


# ---------------------------------------- main -----------------------------------------

if __name__ == "__main__":
    key = jax.random.PRNGKey(0)
    kx, kw = jax.random.split(key)

    B, CIN, D, H, W = 2, 8, 16, 16, 16              # geo_feat_channels = 8
    NUM_CLASS = 12

    x = jax.random.normal(kx, (B, CIN, D, H, W), jnp.float32)
    conv_weight = 0.05 * jax.random.normal(kw, (NUM_CLASS, CIN, 1, 1, 1), jnp.float32)

    fwd = jax.jit(header_forward)
    ssc_logit = fwd(x, conv_weight)
    jax.block_until_ready(ssc_logit)

    assert ssc_logit.shape == (B, NUM_CLASS, D, H, W)

    # Correctness check against a plain-JAX reference of the 1x1x1 conv.
    ref = jnp.einsum("bcdhw,oc->bodhw", x, conv_weight[:, :, 0, 0, 0])
    assert jnp.allclose(ssc_logit, ref, atol=1e-4, rtol=1e-4)

    print("KERNEL_OK")
</pallas_src>

<mosaic_0001>
module attributes {stable_mosaic.version = 11 : i64} {
  func.func @_pointwise_conv_kernel(%arg0: i32, %arg1: i32, %arg2: memref<1x8x2048xf32, #tpu.memory_space<vmem>>, %arg3: memref<12x8xf32, #tpu.memory_space<vmem>>, %arg4: memref<1x12x2048xf32, #tpu.memory_space<vmem>>) attributes {dimension_semantics = [#tpu.dimension_semantics<parallel>, #tpu.dimension_semantics<parallel>], iteration_bounds = array<i64: 2, 2>, scalar_prefetch = 0 : i64, scratch_operands = 0 : i64, tpu.core_type = #tpu.core_type<tc>, window_params = [{transform_indices = @transform_0, window_bounds = array<i64: 1, 8, 2048>}, {pipeline_mode = #tpu.pipeline_mode<synchronous>, transform_indices = @transform_1, window_bounds = array<i64: 12, 8>}, {transform_indices = @transform_2, window_bounds = array<i64: 1, 12, 2048>}]} {
    %c0 = arith.constant 0 : index
    %c0_0 = arith.constant 0 : index
    %c0_1 = arith.constant 0 : index
    %0 = vector.load %arg2[%c0, %c0_0, %c0_1] : memref<1x8x2048xf32, #tpu.memory_space<vmem>>, vector<1x8x2048xf32>
    %1 = vector.shape_cast %0 : vector<1x8x2048xf32> to vector<8x2048xf32>
    %c0_2 = arith.constant 0 : index
    %c0_3 = arith.constant 0 : index
    %2 = vector.load %arg3[%c0_2, %c0_3] : memref<12x8xf32, #tpu.memory_space<vmem>>, vector<12x8xf32>
    %cst = arith.constant dense<0.000000e+00> : vector<12x2048xf32>
    %3 = tpu.matmul %2, %1, %cst {dimension_numbers = #tpu.dot_dimension_numbers<[1], [0], [0], [1], [0, 0, 1, 1], [], []>} : vector<12x8xf32>, vector<8x2048xf32>, vector<12x2048xf32> -> vector<12x2048xf32>
    %c0_4 = arith.constant 0 : index
    %c0_5 = arith.constant 0 : index
    %c0_6 = arith.constant 0 : index
    %4 = vector.load %arg4[%c0_4, %c0_5, %c0_6] : memref<1x12x2048xf32, #tpu.memory_space<vmem>>, vector<1x12x2048xf32>
    %5 = vector.shape_cast %4 : vector<1x12x2048xf32> to vector<12x2048xf32>
    %6 = vector.shape_cast %3 : vector<12x2048xf32> to vector<1x12x2048xf32>
    tpu.vector_store %arg4[%c0_4, %c0_5, %c0_6], %6 {strides = array<i32>} : memref<1x12x2048xf32, #tpu.memory_space<vmem>>, vector<1x12x2048xf32>,
    return
  }
  func.func @transform_0(%arg0: i32, %arg1: i32) -> (i32, i32, i32) {
    %c0_i32 = arith.constant 0 : i32
    %c0_i32_0 = arith.constant 0 : i32
    return %arg0, %c0_i32, %arg1 : i32, i32, i32
  }
  func.func @transform_1(%arg0: i32, %arg1: i32) -> (i32, i32) {
    %c0_i32 = arith.constant 0 : i32
    %c0_i32_0 = arith.constant 0 : i32
    %c0_i32_1 = arith.constant 0 : i32
    return %c0_i32, %c0_i32_0 : i32, i32
  }
  func.func @transform_2(%arg0: i32, %arg1: i32) -> (i32, i32, i32) {
    %c0_i32 = arith.constant 0 : i32
    %c0_i32_0 = arith.constant 0 : i32
    return %arg0, %c0_i32, %arg1 : i32, i32, i32
  }
}

</mosaic_0001>

<llo_original>
// kernel: header_forward.1
$region0: #{header_forward.1}
  #allocation0 [shape = 'u32[]', space=smem, size = 0x4, offset = 0x4, fixed_abs, tag = 'smem constant byte address 0x4 - core index']
  #allocation1 [shape = 'u32[72,128]{1,0:T(1,128)}', space=vmem, size = 0x9000, scoped, tag = 'internal scratch']
  %s0 = inlined_call_operand.vmem [shape: f32[2,8,4096], index: 0, kind: input, shape index: {}]
  %s1 = inlined_call_operand.vmem [shape: f32[12,8], index: 1, kind: input, shape index: {}]
  %s2 = inlined_call_operand.vmem [shape: f32[2,12,4096], index: 2, kind: output, shape index: {}]
  %s3 = sld [smem:[#allocation0]]
  $region60: #{header_forward.1} parent=0
    _
  %s5 = ssub.s32 1, %s3
  %s6 = scalar_select 0, %s5, %s3
  $region1: #{header_forward.1} parent=0
    #allocation2 [shape = 'u8[262144]{0}', space=vmem, size = 0x40000, scoped, tag = 'output window, operand 0']
    loop: start=0, step=1, limit=6
    $region2: #{header_forward.1} parent=1 // loop_pre_header
      _
    $region3: #{header_forward.1} parent=1 // loop_header
      %s8 = sphi 0, %s12
      %p9 = scmp.ge.s32.totalorder %s8, 6
      %s15 = sphi 0, %s27
      %s16 = sphi 0, %s23
      %s17 = sphi 0, %s15
      %s18 = sphi 0, %s16
      %s19 = sphi 0, %s17
      %s20 = sphi 0, %s18
      %s32 = sphi 0, %s34
      %s35 = sphi 0, %s32
      %s36 = sphi 0, %s35
      %s52 = sphi 0, %s36
      %s56 = sphi 0, %s56
      %s58 = sphi 0, %s56
      %s59 = sphi 0, %s58
      %s73 = sphi 0, %s59
      %s81 = sphi 0, %s83
      %s84 = sphi 0, %s81
      %s85 = sphi 0, %s84
      %s101 = sphi 0, %s85
    $region4: #{header_forward.1} parent=1 // loop_header_branch
      %11 = sbr.rel (%p9) target = $region8
    $region5: #{header_forward.1} parent=1 // loop_body
      %s13 = ssub.s32 %s8, 1
      %s14 = ssub.s32 %s8, 2
      %s21 = sadd.s32 1, %s16
      %p22 = scmp.ge.s32.totalorder %s21, 2
      %s23 = scalar_select %p22, 0, %s21
      %s24 = sadd.s32 1, %s15
      %s25 = scalar_select %p22, %s24, %s15
      %p26 = scmp.ge.s32.totalorder %s25, 2
      %s27 = scalar_select %p26, 0, %s25
      %s28 = ssub.s32 %s15, %s27
      %s29 = ssub.s32 %s16, %s23
      %s30 = sor.u32 %s28, %s29
      %p31 = scmp.eq.s32.totalorder %s30, 0
      %s33 = sadd.s32 %s32, 1
      %s34 = scalar_select %p31, %s32, %s33
      %p37 = pneg %p31
      %p38 = scmp.eq.s32.totalorder %s8, 3
      %p39 = por %p37, %p38
      %p40 = scmp.ne.s32.totalorder %s32, %s35
      %p41 = scmp.eq.s32.totalorder %s8, 0
      %p42 = por %p40, %p41
      %p43 = scmp.ne.s32.totalorder %s32, %s35
      %p44 = scmp.eq.s32.totalorder %s13, 3
      %p45 = por %p43, %p44
      %p46 = scmp.ne.s32.totalorder %s35, %s36
      %p47 = scmp.eq.s32.totalorder %s13, 0
      %p48 = por %p46, %p47
      %p49 = scmp.ne.s32.totalorder %s35, %s36
      %p50 = scmp.eq.s32.totalorder %s14, 3
      %p51 = por %p49, %p50
      %p53 = scmp.ne.s32.totalorder %s36, %s52
      %p54 = scmp.eq.s32.totalorder %s14, 0
      %p55 = por %p53, %p54
      %s57 = sadd.s32 %s56, 1
      %p60 = scmp.eq.s32.totalorder %s8, 3
      %p61 = scmp.ne.s32.totalorder %s56, %s58
      %p62 = scmp.eq.s32.totalorder %s8, 0
      %p63 = por %p61, %p62
      %p64 = scmp.ne.s32.totalorder %s56, %s58
      %p65 = scmp.eq.s32.totalorder %s13, 3
      %p66 = por %p64, %p65
      %p67 = scmp.ne.s32.totalorder %s58, %s59
      %p68 = scmp.eq.s32.totalorder %s13, 0
      %p69 = por %p67, %p68
      %p70 = scmp.ne.s32.totalorder %s58, %s59
      %p71 = scmp.eq.s32.totalorder %s14, 3
      %p72 = por %p70, %p71
      %p74 = scmp.ne.s32.totalorder %s59, %s73
      %p75 = scmp.eq.s32.totalorder %s14, 0
      %p76 = por %p74, %p75
      %s77 = ssub.s32 %s15, %s27
      %s78 = ssub.s32 %s16, %s23
      %s79 = sor.u32 %s77, %s78
      %p80 = scmp.eq.s32.totalorder %s79, 0
      %s82 = sadd.s32 %s81, 1
      %s83 = scalar_select %p80, %s81, %s82
      %p86 = pneg %p80
      %p87 = scmp.eq.s32.totalorder %s8, 3
      %p88 = por %p86, %p87
      %p89 = scmp.ne.s32.totalorder %s81, %s84
      %p90 = scmp.eq.s32.totalorder %s8, 0
      %p91 = por %p89, %p90
      %p92 = scmp.ne.s32.totalorder %s81, %s84
      %p93 = scmp.eq.s32.totalorder %s13, 3
      %p94 = por %p92, %p93
      %p95 = scmp.ne.s32.totalorder %s84, %s85
      %p96 = scmp.eq.s32.totalorder %s13, 0
      %p97 = por %p95, %p96
      %p98 = scmp.ne.s32.totalorder %s84, %s85
      %p99 = scmp.eq.s32.totalorder %s14, 3
      %p100 = por %p98, %p99
      %p102 = scmp.ne.s32.totalorder %s85, %s101
      %p103 = scmp.eq.s32.totalorder %s14, 0
      %p104 = por %p102, %p103
      %p105 = scmp.le.s32.totalorder 1, %s8
      %p106 = scmp.lt.s32.totalorder %s8, 5
      %p107 = pnand %p105, %p106
      %p108 = pneg %p107
      // Predicated region
      $region9: #{header_forward.1} parent=5 // pred_check
        _
      $region10: #{header_forward.1} parent=5 // pred_check_branch
        %110 = sbr.rel (%p107) target = $region12
      $region11: #{header_forward.1} parent=5 // pred_region
        %s111 = ssub.s32 %s8, 1
        // Predicated region
        $region13: #{header_forward.1} parent=11 // pred_check
          %p112 = pneg %p69
        $region14: #{header_forward.1} parent=11 // pred_check_branch
          %114 = sbr.rel (%p112) target = $region16
        $region15: #{header_forward.1} parent=11 // pred_region
          _
        $region16: #{header_forward.1} parent=11 // pred_fallthru
          _
      $region12: #{header_forward.1} parent=5 // pred_fallthru
        _
      %p115 = scmp.lt.s32.totalorder %s8, 4
      // Predicated region
      $region17: #{header_forward.1} parent=5 // pred_check
        %p116 = pneg %p115
      $region18: #{header_forward.1} parent=5 // pred_check_branch
        %118 = sbr.rel (%p116) target = $region20
      $region19: #{header_forward.1} parent=5 // pred_region
        // Predicated region
        $region21: #{header_forward.1} parent=19 // pred_check
          %p119 = pneg %p42
        $region22: #{header_forward.1} parent=19 // pred_check_branch
          %121 = sbr.rel (%p119) target = $region24
        $region23: #{header_forward.1} parent=19 // pred_region
          %s122 = smul.u32 16, %s16
          %p123 = scmp.lt.s32.totalorder %s15, 1
          %s124 = scalar_select %p123, %s15, 1
          %p125 = scmp.lt.s32.totalorder %s122, 31
          %s126 = scalar_select %p125, %s122, 31
          %s127 = smul.addr %s124, 32
          %s128 = sadd.s32 %s126, %s127
          %s129 = smul.addr %s128, 8
          %s130 = scalar_lea.vmem %s0, %s129
          %s131 = smul.u32 16, %s16
        $region24: #{header_forward.1} parent=19 // pred_fallthru
          _
      $region20: #{header_forward.1} parent=5 // pred_fallthru
        _
      %p132 = scmp.le.s32.totalorder 1, %s8
      %p133 = scmp.lt.s32.totalorder %s8, 5
      %p134 = pnand %p132, %p133
      %p135 = pneg %p134
      // Predicated region
      $region25: #{header_forward.1} parent=5 // pred_check
        _
      $region26: #{header_forward.1} parent=5 // pred_check_branch
        %137 = sbr.rel (%p134) target = $region28
      $region27: #{header_forward.1} parent=5 // pred_region
        %s138 = ssub.s32 %s8, 1
        %s139 = smul.u32 16, %s18
        %p140 = scmp.lt.s32.totalorder %s17, 1
        %s141 = scalar_select %p140, %s17, 1
        %p142 = scmp.lt.s32.totalorder %s139, 31
        %s143 = scalar_select %p142, %s139, 31
        %s144 = smul.addr %s141, 32
        %s145 = sadd.s32 %s143, %s144
        %s146 = smul.addr %s145, 8
        %s147 = scalar_lea.vmem %s0, %s146
        %p148 = pneg %p48
        %p149 = pneg %p45
        %p150 = pneg %p69
        %p151 = pneg %p66
        %p152 = pneg %p97
        %p153 = pneg %p94
        %s154 = sand.u32 %s84, 1
        %s155 = sand.u32 %s84, 1
        %s156 = smul.addr %s155, 256
        %s157 = scalar_lea.vmem [#allocation2], %s156
        %s158 = smul.u32 16, %s18
        %p159 = scmp.lt.s32.totalorder %s17, 1
        %s160 = scalar_select %p159, %s17, 1
        %p161 = scmp.lt.s32.totalorder %s158, 31
        %s162 = scalar_select %p161, %s158, 31
        %s163 = smul.addr %s160, 32
        %s164 = sadd.s32 %s162, %s163
        %s165 = smul.addr %s164, 8
        %s166 = scalar_lea.vmem %s0, %s165
        %s167 = smul.u32 16, %s18
        %s168 = smul.u32 16, %s18
        %v169 = vld [vmem:[%s166] sm:$0xff]
        %v170 = vld [vmem:[%s166 + $0x8] sm:$0xff]
        %v171 = vld [vmem:[%s166 + $0x10] sm:$0xff]
        %v172 = vld [vmem:[%s166 + $0x18] sm:$0xff]
        %v173 = vld [vmem:[%s166 + $0x20] sm:$0xff]
        %v174 = vld [vmem:[%s166 + $0x28] sm:$0xff]
        %v175 = vld [vmem:[%s166 + $0x30] sm:$0xff]
        %v176 = vld [vmem:[%s166 + $0x38] sm:$0xff]
        %v177 = vld [vmem:[%s166 + $0x40] sm:$0xff]
        %v178 = vld [vmem:[%s166 + $0x48] sm:$0xff]
        %v179 = vld [vmem:[%s166 + $0x50] sm:$0xff]
        %v180 = vld [vmem:[%s166 + $0x58] sm:$0xff]
        %v181 = vld [vmem:[%s166 + $0x60] sm:$0xff]
        %v182 = vld [vmem:[%s166 + $0x68] sm:$0xff]
        %v183 = vld [vmem:[%s166 + $0x70] sm:$0xff]
        %v184 = vld [vmem:[%s166 + $0x78] sm:$0xff]
        %v185 = vld [vmem:[%s1] sm:$0xff]
        %v186 = vld [vmem:[%s1 + $0x8] sm:$0xf]
        %vm187 = vcmask 64512
        %v189 = vsel %vm187, %v185, 0
        %v192 = vsel %vm187, %v186, 0
        %194 = vmatpush.msra.mxu0 0.0
        %195 = vmatpush.msra.mxu0 0.0
        %196 = vmatpush.msra.mxu0 0.0
        %197 = vmatpush.msra.mxu0 0.0
        %198 = vmatpush.msra.mxu0 0.0
        %199 = vmatpush.msra.mxu0 0.0
        %200 = vmatpush.msra.mxu0 0.0
        %201 = vmatpush.msra.mxu0 0.0
        %202 = vmatpush.msra.mxu0 0.0
        %203 = vmatpush.msra.mxu0 0.0
        %204 = vmatpush.msra.mxu0 0.0
        %205 = vmatpush.msra.mxu0 0.0
        %206 = vmatpush.msra.mxu0 0.0
        %207 = vmatpush.msra.mxu0 0.0
        %208 = vmatpush.msra.mxu0 0.0
        %209 = vmatpush.msra.mxu0 %v169
        %210 = vmatmul.f32.gmra.mxu0 %v189
        %v211 = vpop.f32.mrf.mxu0
        %v212 = vadd.f32 0.0, %v211
        %213 = vmatmul.f32.gmra.mxu0 %v192
        %v214 = vpop.f32.mrf.mxu0
        %v215 = vadd.f32 0.0, %v214
        %216 = vdwg.mxu0
        %217 = vmatpush.msra.mxu0 0.0
        %218 = vmatpush.msra.mxu0 0.0
        %219 = vmatpush.msra.mxu0 0.0
        %220 = vmatpush.msra.mxu0 0.0
        %221 = vmatpush.msra.mxu0 0.0
        %222 = vmatpush.msra.mxu0 0.0
        %223 = vmatpush.msra.mxu0 0.0
        %224 = vmatpush.msra.mxu0 0.0
        %225 = vmatpush.msra.mxu0 0.0
        %226 = vmatpush.msra.mxu0 0.0
        %227 = vmatpush.msra.mxu0 0.0
        %228 = vmatpush.msra.mxu0 0.0
        %229 = vmatpush.msra.mxu0 0.0
        %230 = vmatpush.msra.mxu0 0.0
        %231 = vmatpush.msra.mxu0 0.0
        %232 = vmatpush.msra.mxu0 %v170
        %233 = vmatmul.f32.gmra.mxu0 %v189
        %v234 = vpop.f32.mrf.mxu0
        %v235 = vadd.f32 0.0, %v234
        %236 = vmatmul.f32.gmra.mxu0 %v192
        %v237 = vpop.f32.mrf.mxu0
        %v238 = vadd.f32 0.0, %v237
        %239 = vdwg.mxu0
        %240 = vmatpush.msra.mxu0 0.0
        %241 = vmatpush.msra.mxu0 0.0
        %242 = vmatpush.msra.mxu0 0.0
        %243 = vmatpush.msra.mxu0 0.0
        %244 = vmatpush.msra.mxu0 0.0
        %245 = vmatpush.msra.mxu0 0.0
        %246 = vmatpush.msra.mxu0 0.0
        %247 = vmatpush.msra.mxu0 0.0
        %248 = vmatpush.msra.mxu0 0.0
        %249 = vmatpush.msra.mxu0 0.0
        %250 = vmatpush.msra.mxu0 0.0
        %251 = vmatpush.msra.mxu0 0.0
        %252 = vmatpush.msra.mxu0 0.0
        %253 = vmatpush.msra.mxu0 0.0
        %254 = vmatpush.msra.mxu0 0.0
        %255 = vmatpush.msra.mxu0 %v171
        %256 = vmatmul.f32.gmra.mxu0 %v189
        %v257 = vpop.f32.mrf.mxu0
        %v258 = vadd.f32 0.0, %v257
        %259 = vmatmul.f32.gmra.mxu0 %v192
        %v260 = vpop.f32.mrf.mxu0
        %v261 = vadd.f32 0.0, %v260
        %262 = vdwg.mxu0
        %263 = vmatpush.msra.mxu0 0.0
        %264 = vmatpush.msra.mxu0 0.0
        %265 = vmatpush.msra.mxu0 0.0
        %266 = vmatpush.msra.mxu0 0.0
        %267 = vmatpush.msra.mxu0 0.0
        %268 = vmatpush.msra.mxu0 0.0
        %269 = vmatpush.msra.mxu0 0.0
        %270 = vmatpush.msra.mxu0 0.0
        %271 = vmatpush.msra.mxu0 0.0
        %272 = vmatpush.msra.mxu0 0.0
        %273 = vmatpush.msra.mxu0 0.0
        %274 = vmatpush.msra.mxu0 0.0
        %275 = vmatpush.msra.mxu0 0.0
        %276 = vmatpush.msra.mxu0 0.0
        %277 = vmatpush.msra.mxu0 0.0
        %278 = vmatpush.msra.mxu0 %v172
        %279 = vmatmul.f32.gmra.mxu0 %v189
        %v280 = vpop.f32.mrf.mxu0
        %v281 = vadd.f32 0.0, %v280
        %282 = vmatmul.f32.gmra.mxu0 %v192
        %v283 = vpop.f32.mrf.mxu0
        %v284 = vadd.f32 0.0, %v283
        %285 = vdwg.mxu0
        %286 = vmatpush.msra.mxu0 0.0
        %287 = vmatpush.msra.mxu0 0.0
        %288 = vmatpush.msra.mxu0 0.0
        %289 = vmatpush.msra.mxu0 0.0
        %290 = vmatpush.msra.mxu0 0.0
        %291 = vmatpush.msra.mxu0 0.0
        %292 = vmatpush.msra.mxu0 0.0
        %293 = vmatpush.msra.mxu0 0.0
        %294 = vmatpush.msra.mxu0 0.0
        %295 = vmatpush.msra.mxu0 0.0
        %296 = vmatpush.msra.mxu0 0.0
        %297 = vmatpush.msra.mxu0 0.0
        %298 = vmatpush.msra.mxu0 0.0
        %299 = vmatpush.msra.mxu0 0.0
        %300 = vmatpush.msra.mxu0 0.0
        %301 = vmatpush.msra.mxu0 %v173
        %302 = vmatmul.f32.gmra.mxu0 %v189
        %v303 = vpop.f32.mrf.mxu0
        %v304 = vadd.f32 0.0, %v303
        %305 = vmatmul.f32.gmra.mxu0 %v192
        %v306 = vpop.f32.mrf.mxu0
        %v307 = vadd.f32 0.0, %v306
        %308 = vdwg.mxu0
        %309 = vmatpush.msra.mxu0 0.0
        %310 = vmatpush.msra.mxu0 0.0
        %311 = vmatpush.msra.mxu0 0.0
        %312 = vmatpush.msra.mxu0 0.0
        %313 = vmatpush.msra.mxu0 0.0
        %314 = vmatpush.msra.mxu0 0.0
        %315 = vmatpush.msra.mxu0 0.0
        %316 = vmatpush.msra.mxu0 0.0
        %317 = vmatpush.msra.mxu0 0.0
        %318 = vmatpush.msra.mxu0 0.0
        %319 = vmatpush.msra.mxu0 0.0
        %320 = vmatpush.msra.mxu0 0.0
        %321 = vmatpush.msra.mxu0 0.0
        %322 = vmatpush.msra.mxu0 0.0
        %323 = vmatpush.msra.mxu0 0.0
        %324 = vmatpush.msra.mxu0 %v174
        %325 = vmatmul.f32.gmra.mxu0 %v189
        %v326 = vpop.f32.mrf.mxu0
        %v327 = vadd.f32 0.0, %v326
        %328 = vmatmul.f32.gmra.mxu0 %v192
        %v329 = vpop.f32.mrf.mxu0
        %v330 = vadd.f32 0.0, %v329
        %331 = vdwg.mxu0
        %332 = vmatpush.msra.mxu0 0.0
        %333 = vmatpush.msra.mxu0 0.0
        %334 = vmatpush.msra.mxu0 0.0
        %335 = vmatpush.msra.mxu0 0.0
        %336 = vmatpush.msra.mxu0 0.0
        %337 = vmatpush.msra.mxu0 0.0
        %338 = vmatpush.msra.mxu0 0.0
        %339 = vmatpush.msra.mxu0 0.0
        %340 = vmatpush.msra.mxu0 0.0
        %341 = vmatpush.msra.mxu0 0.0
        %342 = vmatpush.msra.mxu0 0.0
        %343 = vmatpush.msra.mxu0 0.0
        %344 = vmatpush.msra.mxu0 0.0
        %345 = vmatpush.msra.mxu0 0.0
        %346 = vmatpush.msra.mxu0 0.0
        %347 = vmatpush.msra.mxu0 %v175
        %348 = vmatmul.f32.gmra.mxu0 %v189
        %v349 = vpop.f32.mrf.mxu0
        %v350 = vadd.f32 0.0, %v349
        %351 = vmatmul.f32.gmra.mxu0 %v192
        %v352 = vpop.f32.mrf.mxu0
        %v353 = vadd.f32 0.0, %v352
        %354 = vdwg.mxu0
        %355 = vmatpush.msra.mxu0 0.0
        %356 = vmatpush.msra.mxu0 0.0
        %357 = vmatpush.msra.mxu0 0.0
        %358 = vmatpush.msra.mxu0 0.0
        %359 = vmatpush.msra.mxu0 0.0
        %360 = vmatpush.msra.mxu0 0.0
        %361 = vmatpush.msra.mxu0 0.0
        %362 = vmatpush.msra.mxu0 0.0
        %363 = vmatpush.msra.mxu0 0.0
        %364 = vmatpush.msra.mxu0 0.0
        %365 = vmatpush.msra.mxu0 0.0
        %366 = vmatpush.msra.mxu0 0.0
        %367 = vmatpush.msra.mxu0 0.0
        %368 = vmatpush.msra.mxu0 0.0
        %369 = vmatpush.msra.mxu0 0.0
        %370 = vmatpush.msra.mxu0 %v176
        %371 = vmatmul.f32.gmra.mxu0 %v189
        %v372 = vpop.f32.mrf.mxu0
        %v373 = vadd.f32 0.0, %v372
        %374 = vmatmul.f32.gmra.mxu0 %v192
        %v375 = vpop.f32.mrf.mxu0
        %v376 = vadd.f32 0.0, %v375
        %377 = vdwg.mxu0
        %378 = vmatpush.msra.mxu0 0.0
        %379 = vmatpush.msra.mxu0 0.0
        %380 = vmatpush.msra.mxu0 0.0
        %381 = vmatpush.msra.mxu0 0.0
        %382 = vmatpush.msra.mxu0 0.0
        %383 = vmatpush.msra.mxu0 0.0
        %384 = vmatpush.msra.mxu0 0.0
        %385 = vmatpush.msra.mxu0 0.0
        %386 = vmatpush.msra.mxu0 0.0
        %387 = vmatpush.msra.mxu0 0.0
        %388 = vmatpush.msra.mxu0 0.0
        %389 = vmatpush.msra.mxu0 0.0
        %390 = vmatpush.msra.mxu0 0.0
        %391 = vmatpush.msra.mxu0 0.0
        %392 = vmatpush.msra.mxu0 0.0
        %393 = vmatpush.msra.mxu0 %v177
        %394 = vmatmul.f32.gmra.mxu0 %v189
        %v395 = vpop.f32.mrf.mxu0
        %v396 = vadd.f32 0.0, %v395
        %397 = vmatmul.f32.gmra.mxu0 %v192
        %v398 = vpop.f32.mrf.mxu0
        %v399 = vadd.f32 0.0, %v398
        %400 = vdwg.mxu0
        %401 = vmatpush.msra.mxu0 0.0
        %402 = vmatpush.msra.mxu0 0.0
        %403 = vmatpush.msra.mxu0 0.0
        %404 = vmatpush.msra.mxu0 0.0
        %405 = vmatpush.msra.mxu0 0.0
        %406 = vmatpush.msra.mxu0 0.0
        %407 = vmatpush.msra.mxu0 0.0
        %408 = vmatpush.msra.mxu0 0.0
        %409 = vmatpush.msra.mxu0 0.0
        %410 = vmatpush.msra.mxu0 0.0
        %411 = vmatpush.msra.mxu0 0.0
        %412 = vmatpush.msra.mxu0 0.0
        %413 = vmatpush.msra.mxu0 0.0
        %414 = vmatpush.msra.mxu0 0.0
        %415 = vmatpush.msra.mxu0 0.0
        %416 = vmatpush.msra.mxu0 %v178
        %417 = vmatmul.f32.gmra.mxu0 %v189
        %v418 = vpop.f32.mrf.mxu0
        %v419 = vadd.f32 0.0, %v418
        %420 = vmatmul.f32.gmra.mxu0 %v192
        %v421 = vpop.f32.mrf.mxu0
        %v422 = vadd.f32 0.0, %v421
        %423 = vdwg.mxu0
        %424 = vmatpush.msra.mxu0 0.0
        %425 = vmatpush.msra.mxu0 0.0
        %426 = vmatpush.msra.mxu0 0.0
        %427 = vmatpush.msra.mxu0 0.0
        %428 = vmatpush.msra.mxu0 0.0
        %429 = vmatpush.msra.mxu0 0.0
        %430 = vmatpush.msra.mxu0 0.0
        %431 = vmatpush.msra.mxu0 0.0
        %432 = vmatpush.msra.mxu0 0.0
        %433 = vmatpush.msra.mxu0 0.0
        %434 = vmatpush.msra.mxu0 0.0
        %435 = vmatpush.msra.mxu0 0.0
        %436 = vmatpush.msra.mxu0 0.0
        %437 = vmatpush.msra.mxu0 0.0
        %438 = vmatpush.msra.mxu0 0.0
        %439 = vmatpush.msra.mxu0 %v179
        %440 = vmatmul.f32.gmra.mxu0 %v189
        %v441 = vpop.f32.mrf.mxu0
        %v442 = vadd.f32 0.0, %v441
        %443 = vmatmul.f32.gmra.mxu0 %v192
        %v444 = vpop.f32.mrf.mxu0
        %v445 = vadd.f32 0.0, %v444
        %446 = vdwg.mxu0
        %447 = vmatpush.msra.mxu0 0.0
        %448 = vmatpush.msra.mxu0 0.0
        %449 = vmatpush.msra.mxu0 0.0
        %450 = vmatpush.msra.mxu0 0.0
        %451 = vmatpush.msra.mxu0 0.0
        %452 = vmatpush.msra.mxu0 0.0
        %453 = vmatpush.msra.mxu0 0.0
        %454 = vmatpush.msra.mxu0 0.0
        %455 = vmatpush.msra.mxu0 0.0
        %456 = vmatpush.msra.mxu0 0.0
        %457 = vmatpush.msra.mxu0 0.0
        %458 = vmatpush.msra.mxu0 0.0
        %459 = vmatpush.msra.mxu0 0.0
        %460 = vmatpush.msra.mxu0 0.0
        %461 = vmatpush.msra.mxu0 0.0
        %462 = vmatpush.msra.mxu0 %v180
        %463 = vmatmul.f32.gmra.mxu0 %v189
        %v464 = vpop.f32.mrf.mxu0
        %v465 = vadd.f32 0.0, %v464
        %466 = vmatmul.f32.gmra.mxu0 %v192
        %v467 = vpop.f32.mrf.mxu0
        %v468 = vadd.f32 0.0, %v467
        %469 = vdwg.mxu0
        %470 = vmatpush.msra.mxu0 0.0
        %471 = vmatpush.msra.mxu0 0.0
        %472 = vmatpush.msra.mxu0 0.0
        %473 = vmatpush.msra.mxu0 0.0
        %474 = vmatpush.msra.mxu0 0.0
        %475 = vmatpush.msra.mxu0 0.0
        %476 = vmatpush.msra.mxu0 0.0
        %477 = vmatpush.msra.mxu0 0.0
        %478 = vmatpush.msra.mxu0 0.0
        %479 = vmatpush.msra.mxu0 0.0
        %480 = vmatpush.msra.mxu0 0.0
        %481 = vmatpush.msra.mxu0 0.0
        %482 = vmatpush.msra.mxu0 0.0
        %483 = vmatpush.msra.mxu0 0.0
        %484 = vmatpush.msra.mxu0 0.0
        %485 = vmatpush.msra.mxu0 %v181
        %486 = vmatmul.f32.gmra.mxu0 %v189
        %v487 = vpop.f32.mrf.mxu0
        %v488 = vadd.f32 0.0, %v487
        %489 = vmatmul.f32.gmra.mxu0 %v192
        %v490 = vpop.f32.mrf.mxu0
        %v491 = vadd.f32 0.0, %v490
        %492 = vdwg.mxu0
        %493 = vmatpush.msra.mxu0 0.0
        %494 = vmatpush.msra.mxu0 0.0
        %495 = vmatpush.msra.mxu0 0.0
        %496 = vmatpush.msra.mxu0 0.0
        %497 = vmatpush.msra.mxu0 0.0
        %498 = vmatpush.msra.mxu0 0.0
        %499 = vmatpush.msra.mxu0 0.0
        %500 = vmatpush.msra.mxu0 0.0
        %501 = vmatpush.msra.mxu0 0.0
        %502 = vmatpush.msra.mxu0 0.0
        %503 = vmatpush.msra.mxu0 0.0
        %504 = vmatpush.msra.mxu0 0.0
        %505 = vmatpush.msra.mxu0 0.0
        %506 = vmatpush.msra.mxu0 0.0
        %507 = vmatpush.msra.mxu0 0.0
        %508 = vmatpush.msra.mxu0 %v182
        %509 = vmatmul.f32.gmra.mxu0 %v189
        %v510 = vpop.f32.mrf.mxu0
        %v511 = vadd.f32 0.0, %v510
        %512 = vmatmul.f32.gmra.mxu0 %v192
        %v513 = vpop.f32.mrf.mxu0
        %v514 = vadd.f32 0.0, %v513
        %515 = vdwg.mxu0
        %516 = vmatpush.msra.mxu0 0.0
        %517 = vmatpush.msra.mxu0 0.0
        %518 = vmatpush.msra.mxu0 0.0
        %519 = vmatpush.msra.mxu0 0.0
        %520 = vmatpush.msra.mxu0 0.0
        %521 = vmatpush.msra.mxu0 0.0
        %522 = vmatpush.msra.mxu0 0.0
        %523 = vmatpush.msra.mxu0 0.0
        %524 = vmatpush.msra.mxu0 0.0
        %525 = vmatpush.msra.mxu0 0.0
        %526 = vmatpush.msra.mxu0 0.0
        %527 = vmatpush.msra.mxu0 0.0
        %528 = vmatpush.msra.mxu0 0.0
        %529 = vmatpush.msra.mxu0 0.0
        %530 = vmatpush.msra.mxu0 0.0
        %531 = vmatpush.msra.mxu0 %v183
        %532 = vmatmul.f32.gmra.mxu0 %v189
        %v533 = vpop.f32.mrf.mxu0
        %v534 = vadd.f32 0.0, %v533
        %535 = vmatmul.f32.gmra.mxu0 %v192
        %v536 = vpop.f32.mrf.mxu0
        %v537 = vadd.f32 0.0, %v536
        %538 = vdwg.mxu0
        %539 = vmatpush.msra.mxu0 0.0
        %540 = vmatpush.msra.mxu0 0.0
        %541 = vmatpush.msra.mxu0 0.0
        %542 = vmatpush.msra.mxu0 0.0
        %543 = vmatpush.msra.mxu0 0.0
        %544 = vmatpush.msra.mxu0 0.0
        %545 = vmatpush.msra.mxu0 0.0
        %546 = vmatpush.msra.mxu0 0.0
        %547 = vmatpush.msra.mxu0 0.0
        %548 = vmatpush.msra.mxu0 0.0
        %549 = vmatpush.msra.mxu0 0.0
        %550 = vmatpush.msra.mxu0 0.0
        %551 = vmatpush.msra.mxu0 0.0
        %552 = vmatpush.msra.mxu0 0.0
        %553 = vmatpush.msra.mxu0 0.0
        %554 = vmatpush.msra.mxu0 %v184
        %555 = vmatmul.f32.gmra.mxu0 %v189
        %v556 = vpop.f32.mrf.mxu0
        %v557 = vadd.f32 0.0, %v556
        %558 = vmatmul.f32.gmra.mxu0 %v192
        %v559 = vpop.f32.mrf.mxu0
        %v560 = vadd.f32 0.0, %v559
        %561 = vdwg.mxu0
        %562 = vst [vmem:[%s157] sm:$0xff] %v212
        %563 = vst [vmem:[%s157 + $0x8] sm:$0xff] %v235
        %564 = vst [vmem:[%s157 + $0x10] sm:$0xff] %v258
        %565 = vst [vmem:[%s157 + $0x18] sm:$0xff] %v281
        %566 = vst [vmem:[%s157 + $0x20] sm:$0xff] %v304
        %567 = vst [vmem:[%s157 + $0x28] sm:$0xff] %v327
        %568 = vst [vmem:[%s157 + $0x30] sm:$0xff] %v350
        %569 = vst [vmem:[%s157 + $0x38] sm:$0xff] %v373
        %570 = vst [vmem:[%s157 + $0x40] sm:$0xff] %v396
        %571 = vst [vmem:[%s157 + $0x48] sm:$0xff] %v419
        %572 = vst [vmem:[%s157 + $0x50] sm:$0xff] %v442
        %573 = vst [vmem:[%s157 + $0x58] sm:$0xff] %v465
        %574 = vst [vmem:[%s157 + $0x60] sm:$0xff] %v488
        %575 = vst [vmem:[%s157 + $0x68] sm:$0xff] %v511
        %576 = vst [vmem:[%s157 + $0x70] sm:$0xff] %v534
        %577 = vst [vmem:[%s157 + $0x78] sm:$0xff] %v557
        %578 = vst [vmem:[%s157 + $0x80] sm:$0xf] %v215
        %579 = vst [vmem:[%s157 + $0x88] sm:$0xf] %v238
        %580 = vst [vmem:[%s157 + $0x90] sm:$0xf] %v261
        %581 = vst [vmem:[%s157 + $0x98] sm:$0xf] %v284
        %582 = vst [vmem:[%s157 + $0xa0] sm:$0xf] %v307
        %583 = vst [vmem:[%s157 + $0xa8] sm:$0xf] %v330
        %584 = vst [vmem:[%s157 + $0xb0] sm:$0xf] %v353
        %585 = vst [vmem:[%s157 + $0xb8] sm:$0xf] %v376
        %586 = vst [vmem:[%s157 + $0xc0] sm:$0xf] %v399
        %587 = vst [vmem:[%s157 + $0xc8] sm:$0xf] %v422
        %588 = vst [vmem:[%s157 + $0xd0] sm:$0xf] %v445
        %589 = vst [vmem:[%s157 + $0xd8] sm:$0xf] %v468
        %590 = vst [vmem:[%s157 + $0xe0] sm:$0xf] %v491
        %591 = vst [vmem:[%s157 + $0xe8] sm:$0xf] %v514
        %592 = vst [vmem:[%s157 + $0xf0] sm:$0xf] %v537
        %593 = vst [vmem:[%s157 + $0xf8] sm:$0xf] %v560
        %s594 = sand.u32 %s84, 1
        %s595 = sand.u32 %s84, 1
        %s596 = smul.addr %s595, 256
        %s597 = scalar_lea.vmem [#allocation2], %s596
        // Predicated region
        $region29: #{header_forward.1} parent=27 // pred_check
          %p598 = pneg %p94
        $region30: #{header_forward.1} parent=27 // pred_check_branch
          %600 = sbr.rel (%p598) target = $region32
        $region31: #{header_forward.1} parent=27 // pred_region
          %s601 = smul.u32 16, %s18
          %s602 = smul.addr %s17, 64
          %s603 = sadd.s32 %s601, %s602
          %s604 = smul.addr %s603, 8
          %s605 = scalar_lea.vmem %s2, %s604
          // Predicated region
          $region33: #{header_forward.1} parent=31 // pred_check
            _
          $region34: #{header_forward.1} parent=31 // pred_check_branch
            %607 = sbr.rel (0) target = $region36
          $region35: #{header_forward.1} parent=31 // pred_region
            // Predicated region
            $region37: #{header_forward.1} parent=35 // pred_check
              _
            $region38: #{header_forward.1} parent=35 // pred_check_branch
              %609 = sbr.rel (0) target = $region40
            $region39: #{header_forward.1} parent=35 // pred_region
              loop: start=0, step=1, limit=1
              $region41: #{header_forward.1} parent=39 // loop_pre_header
                _
              $region42: #{header_forward.1} parent=39 // loop_header
                %s611 = sphi 0, %s615
                %p612 = scmp.ge.s32.totalorder %s611, 1
                %s616 = sphi %s597, %s597
                %s617 = sphi %s605, %s605
              $region43: #{header_forward.1} parent=39 // loop_header_branch
                %614 = sbr.rel (%p612) target = $region47
              $region44: #{header_forward.1} parent=39 // loop_body
                %v618 = vld [vmem:[%s616] sm:$0xff]
                %619 = vst [vmem:[%s617] sm:$0xff] %v618
                %v620 = vld [vmem:[%s616 + $0x8] sm:$0xff]
                %621 = vst [vmem:[%s617 + $0x8] sm:$0xff] %v620
                %v622 = vld [vmem:[%s616 + $0x10] sm:$0xff]
                %623 = vst [vmem:[%s617 + $0x10] sm:$0xff] %v622
                %v624 = vld [vmem:[%s616 + $0x18] sm:$0xff]
                %625 = vst [vmem:[%s617 + $0x18] sm:$0xff] %v624
                %v626 = vld [vmem:[%s616 + $0x20] sm:$0xff]
                %627 = vst [vmem:[%s617 + $0x20] sm:$0xff] %v626
                %v628 = vld [vmem:[%s616 + $0x28] sm:$0xff]
                %629 = vst [vmem:[%s617 + $0x28] sm:$0xff] %v628
                %v630 = vld [vmem:[%s616 + $0x30] sm:$0xff]
                %631 = vst [vmem:[%s617 + $0x30] sm:$0xff] %v630
                %v632 = vld [vmem:[%s616 + $0x38] sm:$0xff]
                %633 = vst [vmem:[%s617 + $0x38] sm:$0xff] %v632
                %v634 = vld [vmem:[%s616 + $0x40] sm:$0xff]
                %635 = vst [vmem:[%s617 + $0x40] sm:$0xff] %v634
                %v636 = vld [vmem:[%s616 + $0x48] sm:$0xff]
                %637 = vst [vmem:[%s617 + $0x48] sm:$0xff] %v636
                %v638 = vld [vmem:[%s616 + $0x50] sm:$0xff]
                %639 = vst [vmem:[%s617 + $0x50] sm:$0xff] %v638
                %v640 = vld [vmem:[%s616 + $0x58] sm:$0xff]
                %641 = vst [vmem:[%s617 + $0x58] sm:$0xff] %v640
                %v642 = vld [vmem:[%s616 + $0x60] sm:$0xff]
                %643 = vst [vmem:[%s617 + $0x60] sm:$0xff] %v642
                %v644 = vld [vmem:[%s616 + $0x68] sm:$0xff]
                %645 = vst [vmem:[%s617 + $0x68] sm:$0xff] %v644
                %v646 = vld [vmem:[%s616 + $0x70] sm:$0xff]
                %647 = vst [vmem:[%s617 + $0x70] sm:$0xff] %v646
                %v648 = vld [vmem:[%s616 + $0x78] sm:$0xff]
                %649 = vst [vmem:[%s617 + $0x78] sm:$0xff] %v648
                %v650 = vld [vmem:[%s616 + $0x80] sm:$0xff]
                %651 = vst [vmem:[%s617 + $0x100] sm:$0xff] %v650
                %v652 = vld [vmem:[%s616 + $0x88] sm:$0xff]
                %653 = vst [vmem:[%s617 + $0x108] sm:$0xff] %v652
                %v654 = vld [vmem:[%s616 + $0x90] sm:$0xff]
                %655 = vst [vmem:[%s617 + $0x110] sm:$0xff] %v654
                %v656 = vld [vmem:[%s616 + $0x98] sm:$0xff]
                %657 = vst [vmem:[%s617 + $0x118] sm:$0xff] %v656
                %v658 = vld [vmem:[%s616 + $0xa0] sm:$0xff]
                %659 = vst [vmem:[%s617 + $0x120] sm:$0xff] %v658
                %v660 = vld [vmem:[%s616 + $0xa8] sm:$0xff]
                %661 = vst [vmem:[%s617 + $0x128] sm:$0xff] %v660
                %v662 = vld [vmem:[%s616 + $0xb0] sm:$0xff]
                %663 = vst [vmem:[%s617 + $0x130] sm:$0xff] %v662
                %v664 = vld [vmem:[%s616 + $0xb8] sm:$0xff]
                %665 = vst [vmem:[%s617 + $0x138] sm:$0xff] %v664
                %v666 = vld [vmem:[%s616 + $0xc0] sm:$0xff]
                %667 = vst [vmem:[%s617 + $0x140] sm:$0xff] %v666
                %v668 = vld [vmem:[%s616 + $0xc8] sm:$0xff]
                %669 = vst [vmem:[%s617 + $0x148] sm:$0xff] %v668
                %v670 = vld [vmem:[%s616 + $0xd0] sm:$0xff]
                %671 = vst [vmem:[%s617 + $0x150] sm:$0xff] %v670
                %v672 = vld [vmem:[%s616 + $0xd8] sm:$0xff]
                %673 = vst [vmem:[%s617 + $0x158] sm:$0xff] %v672
                %v674 = vld [vmem:[%s616 + $0xe0] sm:$0xff]
                %675 = vst [vmem:[%s617 + $0x160] sm:$0xff] %v674
                %v676 = vld [vmem:[%s616 + $0xe8] sm:$0xff]
                %677 = vst [vmem:[%s617 + $0x168] sm:$0xff] %v676
                %v678 = vld [vmem:[%s616 + $0xf0] sm:$0xff]
                %679 = vst [vmem:[%s617 + $0x170] sm:$0xff] %v678
                %v680 = vld [vmem:[%s616 + $0xf8] sm:$0xff]
                %681 = vst [vmem:[%s617 + $0x178] sm:$0xff] %v680
              $region45: #{header_forward.1} parent=39 // loop_footer
                %s615 = sadd.s32 1, %s611
              $region46: #{header_forward.1} parent=39 // loop_footer_branch
                %610 = sbr.rel target = $region42
              $region47: #{header_forward.1} parent=39 // loop_exit
                _
            $region40: #{header_forward.1} parent=35 // pred_fallthru
              _
            // Predicated region
            $region48: #{header_forward.1} parent=35 // pred_check
              _
            $region49: #{header_forward.1} parent=35 // pred_check_branch
              %683 = sbr.rel target = $region51
            $region50: #{header_forward.1} parent=35 // pred_region
              _
            $region51: #{header_forward.1} parent=35 // pred_fallthru
              _
          $region36: #{header_forward.1} parent=31 // pred_fallthru
            _
          %684 = vnop
        $region32: #{header_forward.1} parent=27 // pred_fallthru
          _
      $region28: #{header_forward.1} parent=5 // pred_fallthru
        _
      %p685 = scmp.le.s32.totalorder 2, %s8
      // Predicated region
      $region52: #{header_forward.1} parent=5 // pred_check
        %p686 = pneg %p685
      $region53: #{header_forward.1} parent=5 // pred_check_branch
        %688 = sbr.rel (%p686) target = $region55
      $region54: #{header_forward.1} parent=5 // pred_region
        %s689 = ssub.s32 %s8, 2
        // Predicated region
        $region56: #{header_forward.1} parent=54 // pred_check
          %p690 = pneg %p100
        $region57: #{header_forward.1} parent=54 // pred_check_branch
          %692 = sbr.rel (%p690) target = $region59
        $region58: #{header_forward.1} parent=54 // pred_region
          %s693 = sand.u32 %s85, 1
          %s694 = sand.u32 %s85, 1
          %s695 = smul.addr %s694, 256
          %s696 = scalar_lea.vmem [#allocation2], %s695
        $region59: #{header_forward.1} parent=54 // pred_fallthru
          _
      $region55: #{header_forward.1} parent=5 // pred_fallthru
        _
    $region6: #{header_forward.1} parent=1 // loop_footer
      %s12 = sadd.s32 1, %s8
    $region7: #{header_forward.1} parent=1 // loop_footer_branch
      %7 = sbr.rel target = $region3
    $region8: #{header_forward.1} parent=1 // loop_exit
      _

</llo_original>
